<compile_context>
chip_gen: v6e
topology: v6e:2x2x1
jax: 0.10.0
libtpu: 0.0.40
codegen_flags: <defaults>
</compile_context>

<pallas_src>
import jax
import jax.numpy as jnp
from jax.experimental import pallas as pl
from jax.experimental.pallas import tpu as pltpu


def _stable_a_kernel(alpha_ref, x_ref, q_ref, s_ref, pinv_ref, o_ref):
    alpha = alpha_ref[0, 0]

    # M' = -0.5*Q - S  ==  (-0.5*Q + S).T   (Q symmetric, S skew-symmetric)
    m_t = -0.5 * q_ref[...] - s_ref[...]                       # VPU elementwise

    # t = x @ M'                      (batch, nx) x (nx, nx)   MXU
    t = jnp.dot(x_ref[...], m_t, preferred_element_type=jnp.float32)

    # out = t @ Pinv - alpha * x      (Pinv symmetric => Pinv.T == Pinv)
    out = jnp.dot(t, pinv_ref[...], preferred_element_type=jnp.float32)
    out = out - alpha * x_ref[...]

    o_ref[...] = out.astype(o_ref.dtype)


def _pick_batch_tile(batch):
    """Largest convenient sublane-aligned tile that divides batch."""
    if batch <= 512:
        return batch
    for tb in (512, 256, 128, 64, 32, 16, 8):
        if batch % tb == 0:
            return tb
    return batch


def stable_a_forward(x, q, pinv, s, alpha):
    """x: (batch, nx); q, pinv, s: (nx, nx). Returns (batch, nx)."""
    batch, nx = x.shape
    tb = _pick_batch_tile(batch)
    grid = (pl.cdiv(batch, tb),)
    alpha_arr = jnp.full((1, 1), alpha, dtype=jnp.float32)

    # NOTE: if nx grows large, tile the (nx, nx) operands over K with an
    # 'arbitrary' grid axis and size blocks for v7x's 64 MiB VMEM; at nx=32
    # whole-array blocks are trivially resident.
    return pl.pallas_call(
        _stable_a_kernel,
        out_shape=jax.ShapeDtypeStruct((batch, nx), jnp.float32),
        grid=grid,
        in_specs=[
            pl.BlockSpec(memory_space=pltpu.MemorySpace.SMEM),   # alpha (1,1)
            pl.BlockSpec((tb, nx), lambda i: (i, 0)),            # x
            pl.BlockSpec((nx, nx), lambda i: (0, 0)),            # Q
            pl.BlockSpec((nx, nx), lambda i: (0, 0)),            # S
            pl.BlockSpec((nx, nx), lambda i: (0, 0)),            # Pinv
        ],
        out_specs=pl.BlockSpec((tb, nx), lambda i: (i, 0)),
        compiler_params=pltpu.CompilerParams(
            dimension_semantics=("parallel",)
        ),
    )(alpha_arr, x, q, s, pinv)


def make_params(key, nx):
    """Deterministically build constrained parameters, mirroring geotorch:
    Q, Pinv positive definite; S skew-symmetric."""
    kq, kp, ks = jax.random.split(key, 3)
    gq = jax.random.normal(kq, (nx, nx), jnp.float32)
    gp = jax.random.normal(kp, (nx, nx), jnp.float32)
    gs = jax.random.normal(ks, (nx, nx), jnp.float32)
    q = gq @ gq.T / nx + jnp.eye(nx, dtype=jnp.float32)        # SPD (symmetric)
    pinv = gp @ gp.T / nx + jnp.eye(nx, dtype=jnp.float32)     # SPD (symmetric)
    s = 0.5 * (gs - gs.T)                                      # skew-symmetric
    return q, pinv, s


# TODO(synk): solve_lmi (CVXPY/MOSEK SDP solve) is a host-side solver with no
# Pallas equivalent; only the forward pass is implemented here.

if __name__ == "__main__":
    nx = 32        # config.nx
    alpha = 0.1    # config.alpha
    batch = 8

    key = jax.random.PRNGKey(0)
    kx, kparam = jax.random.split(key)
    x = jax.random.normal(kx, (batch, nx), jnp.float32)
    q, pinv, s = make_params(kparam, nx)

    out = stable_a_forward(x, q, pinv, s, alpha)
    out = jax.block_until_ready(out)

    # Reference check in plain JAX (same math as the PyTorch forward).
    a_ref = pinv @ (-0.5 * q + s) - alpha * jnp.eye(nx, dtype=jnp.float32)
    ref = x @ a_ref.T
    assert out.shape == (batch, nx)
    assert jnp.allclose(out, ref, atol=1e-4, rtol=1e-4)

    print("KERNEL_OK")
</pallas_src>

<mosaic_0001>
module attributes {stable_mosaic.version = 11 : i64} {
  func.func @_stable_a_kernel(%arg0: i32, %arg1: memref<1x1xf32, #tpu.memory_space<smem>>, %arg2: memref<8x32xf32, #tpu.memory_space<vmem>>, %arg3: memref<32x32xf32, #tpu.memory_space<vmem>>, %arg4: memref<32x32xf32, #tpu.memory_space<vmem>>, %arg5: memref<32x32xf32, #tpu.memory_space<vmem>>, %arg6: memref<8x32xf32, #tpu.memory_space<vmem>>) attributes {dimension_semantics = [#tpu.dimension_semantics<parallel>], iteration_bounds = array<i64: 1>, scalar_prefetch = 0 : i64, scratch_operands = 0 : i64, tpu.core_type = #tpu.core_type<tc>, window_params = [{transform_indices = @transform_0, window_bounds = array<i64: 1, 1>}, {transform_indices = @transform_1, window_bounds = array<i64: 8, 32>}, {pipeline_mode = #tpu.pipeline_mode<synchronous>, transform_indices = @transform_2, window_bounds = array<i64: 32, 32>}, {pipeline_mode = #tpu.pipeline_mode<synchronous>, transform_indices = @transform_3, window_bounds = array<i64: 32, 32>}, {pipeline_mode = #tpu.pipeline_mode<synchronous>, transform_indices = @transform_4, window_bounds = array<i64: 32, 32>}, {transform_indices = @transform_5, window_bounds = array<i64: 8, 32>}]} {
    %c0 = arith.constant 0 : index
    %c0_0 = arith.constant 0 : index
    %0 = memref.load %arg1[%c0, %c0_0] : memref<1x1xf32, #tpu.memory_space<smem>>
    %c0_1 = arith.constant 0 : index
    %c0_2 = arith.constant 0 : index
    %1 = vector.load %arg3[%c0_1, %c0_2] : memref<32x32xf32, #tpu.memory_space<vmem>>, vector<32x32xf32>
    %cst = arith.constant -5.000000e-01 : f32
    %2 = vector.broadcast %cst : f32 to vector<32x32xf32>
    %3 = arith.mulf %2, %1 : vector<32x32xf32>
    %c0_3 = arith.constant 0 : index
    %c0_4 = arith.constant 0 : index
    %4 = vector.load %arg4[%c0_3, %c0_4] : memref<32x32xf32, #tpu.memory_space<vmem>>, vector<32x32xf32>
    %5 = arith.subf %3, %4 : vector<32x32xf32>
    %c0_5 = arith.constant 0 : index
    %c0_6 = arith.constant 0 : index
    %6 = vector.load %arg2[%c0_5, %c0_6] : memref<8x32xf32, #tpu.memory_space<vmem>>, vector<8x32xf32>
    %cst_7 = arith.constant dense<0.000000e+00> : vector<8x32xf32>
    %7 = tpu.matmul %6, %5, %cst_7 {dimension_numbers = #tpu.dot_dimension_numbers<[1], [0], [0], [1], [0, 0, 1, 1], [], []>} : vector<8x32xf32>, vector<32x32xf32>, vector<8x32xf32> -> vector<8x32xf32>
    %c0_8 = arith.constant 0 : index
    %c0_9 = arith.constant 0 : index
    %8 = vector.load %arg5[%c0_8, %c0_9] : memref<32x32xf32, #tpu.memory_space<vmem>>, vector<32x32xf32>
    %cst_10 = arith.constant dense<0.000000e+00> : vector<8x32xf32>
    %9 = tpu.matmul %7, %8, %cst_10 {dimension_numbers = #tpu.dot_dimension_numbers<[1], [0], [0], [1], [0, 0, 1, 1], [], []>} : vector<8x32xf32>, vector<32x32xf32>, vector<8x32xf32> -> vector<8x32xf32>
    %c0_11 = arith.constant 0 : index
    %c0_12 = arith.constant 0 : index
    %10 = vector.load %arg2[%c0_11, %c0_12] : memref<8x32xf32, #tpu.memory_space<vmem>>, vector<8x32xf32>
    %11 = vector.broadcast %0 : f32 to vector<8x32xf32>
    %12 = arith.mulf %11, %10 : vector<8x32xf32>
    %13 = arith.subf %9, %12 : vector<8x32xf32>
    %c0_13 = arith.constant 0 : index
    %c0_14 = arith.constant 0 : index
    %14 = vector.load %arg6[%c0_13, %c0_14] : memref<8x32xf32, #tpu.memory_space<vmem>>, vector<8x32xf32>
    tpu.vector_store %arg6[%c0_13, %c0_14], %13 {strides = array<i32>} : memref<8x32xf32, #tpu.memory_space<vmem>>, vector<8x32xf32>,
    return
  }
  func.func @transform_0(%arg0: i32) -> (i32, i32) {
    %c0_i32 = arith.constant 0 : i32
    %c0_i32_0 = arith.constant 0 : i32
    %c0_i32_1 = arith.constant 0 : i32
    return %c0_i32, %c0_i32_0 : i32, i32
  }
  func.func @transform_1(%arg0: i32) -> (i32, i32) {
    %c0_i32 = arith.constant 0 : i32
    %c0_i32_0 = arith.constant 0 : i32
    return %arg0, %c0_i32 : i32, i32
  }
  func.func @transform_2(%arg0: i32) -> (i32, i32) {
    %c0_i32 = arith.constant 0 : i32
    %c0_i32_0 = arith.constant 0 : i32
    %c0_i32_1 = arith.constant 0 : i32
    return %c0_i32, %c0_i32_0 : i32, i32
  }
  func.func @transform_3(%arg0: i32) -> (i32, i32) {
    %c0_i32 = arith.constant 0 : i32
    %c0_i32_0 = arith.constant 0 : i32
    %c0_i32_1 = arith.constant 0 : i32
    return %c0_i32, %c0_i32_0 : i32, i32
  }
  func.func @transform_4(%arg0: i32) -> (i32, i32) {
    %c0_i32 = arith.constant 0 : i32
    %c0_i32_0 = arith.constant 0 : i32
    %c0_i32_1 = arith.constant 0 : i32
    return %c0_i32, %c0_i32_0 : i32, i32
  }
  func.func @transform_5(%arg0: i32) -> (i32, i32) {
    %c0_i32 = arith.constant 0 : i32
    %c0_i32_0 = arith.constant 0 : i32
    return %arg0, %c0_i32 : i32, i32
  }
}

</mosaic_0001>

<llo_original>
// kernel: tpu_custom_call.1
$region0: #{tpu_custom_call.1}
  #allocation0 [shape = 'u32[]', space=smem, size = 0x4, offset = 0x4, fixed_abs, tag = 'smem constant byte address 0x4 - core index']
  #allocation1 [shape = 'u32[144,128]{1,0:T(1,128)}', space=vmem, size = 0x12000, scoped, tag = 'internal scratch']
  #allocation2 [shape = 'f32[1,1]{1,0:T(1,128)S(6)}', space=smem, size = 0x200, scoped, tag = 'scoped memory for tpu_custom_call.1']
  %s0 = inlined_call_operand.<no memory space> [shape: f32[1,1], index: 0, kind: input, shape index: {}]
  %s1 = inlined_call_operand.hbm [shape: f32[8,32], index: 1, kind: input, shape index: {}]
  %s2 = inlined_call_operand.hbm [shape: f32[32,32], index: 2, kind: input, shape index: {}]
  %s3 = inlined_call_operand.hbm [shape: f32[32,32], index: 3, kind: input, shape index: {}]
  %s4 = inlined_call_operand.hbm [shape: f32[32,32], index: 4, kind: input, shape index: {}]
  %s5 = inlined_call_operand.hbm [shape: f32[8,32], index: 5, kind: output, shape index: {}]
  %s6 = sld [smem:[#allocation0]]
  $region46: #{tpu_custom_call.1} parent=0
    _
  %s8 = ssub.s32 1, %s6
  %s9 = scalar_select 0, %s8, %s6
  %10 = sst [smem:[#allocation2]] %s0
  $region1: #{tpu_custom_call.1} parent=0
    #allocation3 [shape = 'u8[4096]{0}', space=vmem, size = 0x1000, scoped, tag = 'input window, operand 1, single buffered']
    #allocation4 [shape = 's32[1]{0}', space=sflag, size = 0x4, scoped, tag = 'scoped memory for tpu_custom_call.1']
    #allocation5 [shape = 's32[1]{0}', space=sflag, size = 0x4, scoped, tag = 'scoped memory for tpu_custom_call.1']
    #allocation6 [shape = 'u8[16384]{0}', space=vmem, size = 0x4000, scoped, tag = 'input window, operand 2, single buffered']
    #allocation7 [shape = 's32[1]{0}', space=sflag, size = 0x4, scoped, tag = 'scoped memory for tpu_custom_call.1']
    #allocation8 [shape = 'u8[16384]{0}', space=vmem, size = 0x4000, scoped, tag = 'input window, operand 3, single buffered']
    #allocation9 [shape = 'u8[16384]{0}', space=vmem, size = 0x4000, scoped, tag = 'input window, operand 4, single buffered']
    #allocation10 [shape = 's32[1]{0}', space=sflag, size = 0x4, scoped, tag = 'scoped memory for tpu_custom_call.1']
    #allocation11 [shape = 'u8[4096]{0}', space=vmem, size = 0x1000, scoped, tag = 'output window, operand 0, single buffered']
    %11 = vsyncpa [#allocation4], 0
    %12 = vsyncpa [#allocation7], 0
    %13 = vsyncpa [#allocation10], 0
    %14 = vsyncpa [#allocation5], 0
    // Predicated region
    $region2: #{tpu_custom_call.1} parent=1 // pred_check
      _
    $region3: #{tpu_custom_call.1} parent=1 // pred_check_branch
      %16 = sbr.rel (0) target = $region5
    $region4: #{tpu_custom_call.1} parent=1 // pred_region
      _
    $region5: #{tpu_custom_call.1} parent=1 // pred_fallthru
      _
    // Predicated region
    $region6: #{tpu_custom_call.1} parent=1 // pred_check
      _
    $region7: #{tpu_custom_call.1} parent=1 // pred_check_branch
      %18 = sbr.rel (0) target = $region9
    $region8: #{tpu_custom_call.1} parent=1 // pred_region
      %s20 = ssub.s32 128, 128
      %21 = vsyncadd [#allocation4], %s20
      %s23 = sshll.u32 [#allocation3], 4
      %s24 = int_to_ptr.vmem [resolvable:$true] %s23
      %26 = dma.hbm_to_vmem [thread:$0]  %s1, 128, %s24, [#allocation4]
    $region9: #{tpu_custom_call.1} parent=1 // pred_fallthru
      _
    // Predicated region
    $region10: #{tpu_custom_call.1} parent=1 // pred_check
      _
    $region11: #{tpu_custom_call.1} parent=1 // pred_check_branch
      %28 = sbr.rel (0) target = $region13
    $region12: #{tpu_custom_call.1} parent=1 // pred_region
      %s30 = ssub.s32 512, 512
      %31 = vsyncadd [#allocation7], %s30
      %s32 = sshll.u32 [#allocation6], 4
      %s33 = int_to_ptr.vmem [resolvable:$true] %s32
      %38 = dma.hbm_to_vmem [thread:$0]  %s2, 512, %s33, [#allocation7], 128, 128, 8
    $region13: #{tpu_custom_call.1} parent=1 // pred_fallthru
      _
    // Predicated region
    $region14: #{tpu_custom_call.1} parent=1 // pred_check
      _
    $region15: #{tpu_custom_call.1} parent=1 // pred_check_branch
      %40 = sbr.rel (0) target = $region17
    $region16: #{tpu_custom_call.1} parent=1 // pred_region
      %s42 = ssub.s32 512, 512
      %43 = vsyncadd [#allocation7], %s42
      %s44 = sshll.u32 [#allocation8], 4
      %s45 = int_to_ptr.vmem [resolvable:$true] %s44
      %50 = dma.hbm_to_vmem [thread:$0]  %s3, 512, %s45, [#allocation7], 128, 128, 8
    $region17: #{tpu_custom_call.1} parent=1 // pred_fallthru
      _
    // Predicated region
    $region18: #{tpu_custom_call.1} parent=1 // pred_check
      _
    $region19: #{tpu_custom_call.1} parent=1 // pred_check_branch
      %52 = sbr.rel (0) target = $region21
    $region20: #{tpu_custom_call.1} parent=1 // pred_region
      %s54 = ssub.s32 512, 512
      %55 = vsyncadd [#allocation10], %s54
      %s56 = sshll.u32 [#allocation9], 4
      %s57 = int_to_ptr.vmem [resolvable:$true] %s56
      %62 = dma.hbm_to_vmem [thread:$0]  %s4, 512, %s57, [#allocation10], 128, 128, 8
    $region21: #{tpu_custom_call.1} parent=1 // pred_fallthru
      _
    // Predicated region
    $region22: #{tpu_custom_call.1} parent=1 // pred_check
      _
    $region23: #{tpu_custom_call.1} parent=1 // pred_check_branch
      %64 = sbr.rel (0) target = $region25
    $region24: #{tpu_custom_call.1} parent=1 // pred_region
      %65 = dma.done [#allocation4], 128
    $region25: #{tpu_custom_call.1} parent=1 // pred_fallthru
      _
    // Predicated region
    $region26: #{tpu_custom_call.1} parent=1 // pred_check
      _
    $region27: #{tpu_custom_call.1} parent=1 // pred_check_branch
      %67 = sbr.rel (0) target = $region29
    $region28: #{tpu_custom_call.1} parent=1 // pred_region
      %68 = dma.done [#allocation7], 512
    $region29: #{tpu_custom_call.1} parent=1 // pred_fallthru
      _
    // Predicated region
    $region30: #{tpu_custom_call.1} parent=1 // pred_check
      _
    $region31: #{tpu_custom_call.1} parent=1 // pred_check_branch
      %70 = sbr.rel (0) target = $region33
    $region32: #{tpu_custom_call.1} parent=1 // pred_region
      %71 = dma.done [#allocation7], 512
    $region33: #{tpu_custom_call.1} parent=1 // pred_fallthru
      _
    // Predicated region
    $region34: #{tpu_custom_call.1} parent=1 // pred_check
      _
    $region35: #{tpu_custom_call.1} parent=1 // pred_check_branch
      %73 = sbr.rel (0) target = $region37
    $region36: #{tpu_custom_call.1} parent=1 // pred_region
      %74 = dma.done [#allocation10], 512
    $region37: #{tpu_custom_call.1} parent=1 // pred_fallthru
      _
    %s75 = sld [smem:[#allocation2]]
    %v76 = vld [vmem:[#allocation6] sm:$0xff]
    %v77 = vld [vmem:[#allocation6 + $0x8] sm:$0xff]
    %v78 = vld [vmem:[#allocation6 + $0x10] sm:$0xff]
    %v79 = vld [vmem:[#allocation6 + $0x18] sm:$0xff]
    %v80 = vmul.f32 %v76, -0.5
    %v81 = vmul.f32 %v77, -0.5
    %v82 = vmul.f32 %v78, -0.5
    %v83 = vmul.f32 %v79, -0.5
    %v84 = vld [vmem:[#allocation8] sm:$0xff]
    %v85 = vld [vmem:[#allocation8 + $0x8] sm:$0xff]
    %v86 = vld [vmem:[#allocation8 + $0x10] sm:$0xff]
    %v87 = vld [vmem:[#allocation8 + $0x18] sm:$0xff]
    %v88 = vsub.f32 %v80, %v84
    %v89 = vsub.f32 %v81, %v85
    %v90 = vsub.f32 %v82, %v86
    %v91 = vsub.f32 %v83, %v87
    %v92 = vld [vmem:[#allocation3] sm:$0xff]
    %vm93 = vcmask 261120
    %v95 = vsel %vm93, %v92, 0
    %97 = vmatprep.subr.mxu0 0.0
    %98 = vmatpush1.msra.mxu0 0.0
    %99 = vmatprep.subr.mxu0 0.0
    %100 = vmatpush1.msra.mxu0 0.0
    %101 = vmatprep.subr.mxu0 0.0
    %102 = vmatpush1.msra.mxu0 0.0
    %103 = vmatprep.subr.mxu0 0.0
    %104 = vmatpush1.msra.mxu0 0.0
    %105 = vmatprep.subr.mxu0 0.0
    %106 = vmatpush1.msra.mxu0 0.0
    %107 = vmatprep.subr.mxu0 0.0
    %108 = vmatpush1.msra.mxu0 0.0
    %109 = vmatprep.subr.mxu0 0.0
    %110 = vmatpush1.msra.mxu0 0.0
    %111 = vmatprep.subr.mxu0 0.0
    %112 = vmatpush1.msra.mxu0 0.0
    %113 = vmatprep.subr.mxu0 0.0
    %114 = vmatpush1.msra.mxu0 0.0
    %115 = vmatprep.subr.mxu0 0.0
    %116 = vmatpush1.msra.mxu0 0.0
    %117 = vmatprep.subr.mxu0 0.0
    %118 = vmatpush1.msra.mxu0 0.0
    %119 = vmatprep.subr.mxu0 0.0
    %120 = vmatpush1.msra.mxu0 0.0
    %121 = vmatprep.subr.mxu0 0.0
    %122 = vmatpush1.msra.mxu0 %v91
    %123 = vmatprep.subr.mxu0 0.0
    %124 = vmatpush1.msra.mxu0 %v90
    %125 = vmatprep.subr.mxu0 0.0
    %126 = vmatpush1.msra.mxu0 %v89
    %127 = vmatprep.subr.mxu0 0.0
    %128 = vmatpush1.msra.mxu0 %v88
    %129 = vmatprep.subr.mxu0 0.0
    %130 = vmatpush2.msra.mxu0 0.0
    %131 = vmatprep.subr.mxu0 0.0
    %132 = vmatpush2.msra.mxu0 0.0
    %133 = vmatprep.subr.mxu0 0.0
    %134 = vmatpush2.msra.mxu0 0.0
    %135 = vmatprep.subr.mxu0 0.0
    %136 = vmatpush2.msra.mxu0 0.0
    %137 = vmatprep.subr.mxu0 0.0
    %138 = vmatpush2.msra.mxu0 0.0
    %139 = vmatprep.subr.mxu0 0.0
    %140 = vmatpush2.msra.mxu0 0.0
    %141 = vmatprep.subr.mxu0 0.0
    %142 = vmatpush2.msra.mxu0 0.0
    %143 = vmatprep.subr.mxu0 0.0
    %144 = vmatpush2.msra.mxu0 0.0
    %145 = vmatprep.subr.mxu0 0.0
    %146 = vmatpush2.msra.mxu0 0.0
    %147 = vmatprep.subr.mxu0 0.0
    %148 = vmatpush2.msra.mxu0 0.0
    %149 = vmatprep.subr.mxu0 0.0
    %150 = vmatpush2.msra.mxu0 0.0
    %151 = vmatprep.subr.mxu0 0.0
    %152 = vmatpush2.msra.mxu0 0.0
    %153 = vmatprep.subr.mxu0 0.0
    %154 = vmatpush2.msra.mxu0 0.0
    %155 = vmatprep.subr.mxu0 0.0
    %156 = vmatpush2.msra.mxu0 0.0
    %157 = vmatprep.subr.mxu0 0.0
    %158 = vmatpush2.msra.mxu0 0.0
    %159 = vmatprep.subr.mxu0 0.0
    %160 = vmatpush2.msra.mxu0 0.0
    %161 = vmatprep.mubr.f32.mxu0 0.0
    %162 = vmatmul.mubr.f32.gmra.mxu0 %v95
    %v163 = vpop.f32.mrf.mxu0
    %v164 = vadd.f32 0.0, %v163
    %v165 = vpop.f32.mrf.mxu0
    %166 = vdwg.mxu0
    %v167 = vld [vmem:[#allocation9] sm:$0xff]
    %v168 = vld [vmem:[#allocation9 + $0x8] sm:$0xff]
    %v169 = vld [vmem:[#allocation9 + $0x10] sm:$0xff]
    %v170 = vld [vmem:[#allocation9 + $0x18] sm:$0xff]
    %v172 = vsel %vm93, %v164, 0
    %174 = vmatprep.subr.mxu0 0.0
    %175 = vmatpush1.msra.mxu0 0.0
    %176 = vmatprep.subr.mxu0 0.0
    %177 = vmatpush1.msra.mxu0 0.0
    %178 = vmatprep.subr.mxu0 0.0
    %179 = vmatpush1.msra.mxu0 0.0
    %180 = vmatprep.subr.mxu0 0.0
    %181 = vmatpush1.msra.mxu0 0.0
    %182 = vmatprep.subr.mxu0 0.0
    %183 = vmatpush1.msra.mxu0 0.0
    %184 = vmatprep.subr.mxu0 0.0
    %185 = vmatpush1.msra.mxu0 0.0
    %186 = vmatprep.subr.mxu0 0.0
    %187 = vmatpush1.msra.mxu0 0.0
    %188 = vmatprep.subr.mxu0 0.0
    %189 = vmatpush1.msra.mxu0 0.0
    %190 = vmatprep.subr.mxu0 0.0
    %191 = vmatpush1.msra.mxu0 0.0
    %192 = vmatprep.subr.mxu0 0.0
    %193 = vmatpush1.msra.mxu0 0.0
    %194 = vmatprep.subr.mxu0 0.0
    %195 = vmatpush1.msra.mxu0 0.0
    %196 = vmatprep.subr.mxu0 0.0
    %197 = vmatpush1.msra.mxu0 0.0
    %198 = vmatprep.subr.mxu0 0.0
    %199 = vmatpush1.msra.mxu0 %v170
    %200 = vmatprep.subr.mxu0 0.0
    %201 = vmatpush1.msra.mxu0 %v169
    %202 = vmatprep.subr.mxu0 0.0
    %203 = vmatpush1.msra.mxu0 %v168
    %204 = vmatprep.subr.mxu0 0.0
    %205 = vmatpush1.msra.mxu0 %v167
    %206 = vmatprep.subr.mxu0 0.0
    %207 = vmatpush2.msra.mxu0 0.0
    %208 = vmatprep.subr.mxu0 0.0
    %209 = vmatpush2.msra.mxu0 0.0
    %210 = vmatprep.subr.mxu0 0.0
    %211 = vmatpush2.msra.mxu0 0.0
    %212 = vmatprep.subr.mxu0 0.0
    %213 = vmatpush2.msra.mxu0 0.0
    %214 = vmatprep.subr.mxu0 0.0
    %215 = vmatpush2.msra.mxu0 0.0
    %216 = vmatprep.subr.mxu0 0.0
    %217 = vmatpush2.msra.mxu0 0.0
    %218 = vmatprep.subr.mxu0 0.0
    %219 = vmatpush2.msra.mxu0 0.0
    %220 = vmatprep.subr.mxu0 0.0
    %221 = vmatpush2.msra.mxu0 0.0
    %222 = vmatprep.subr.mxu0 0.0
    %223 = vmatpush2.msra.mxu0 0.0
    %224 = vmatprep.subr.mxu0 0.0
    %225 = vmatpush2.msra.mxu0 0.0
    %226 = vmatprep.subr.mxu0 0.0
    %227 = vmatpush2.msra.mxu0 0.0
    %228 = vmatprep.subr.mxu0 0.0
    %229 = vmatpush2.msra.mxu0 0.0
    %230 = vmatprep.subr.mxu0 0.0
    %231 = vmatpush2.msra.mxu0 0.0
    %232 = vmatprep.subr.mxu0 0.0
    %233 = vmatpush2.msra.mxu0 0.0
    %234 = vmatprep.subr.mxu0 0.0
    %235 = vmatpush2.msra.mxu0 0.0
    %236 = vmatprep.subr.mxu0 0.0
    %237 = vmatpush2.msra.mxu0 0.0
    %238 = vmatprep.mubr.f32.mxu0 0.0
    %239 = vmatmul.mubr.f32.gmra.mxu0 %v172
    %v240 = vpop.f32.mrf.mxu0
    %v241 = vadd.f32 0.0, %v240
    %v242 = vpop.f32.mrf.mxu0
    %243 = vdwg.mxu0
    %v244 = vstv %s75
    %v245 = vmul.f32 %v244, %v92
    %v246 = vsub.f32 %v241, %v245
    %247 = vst.msk [vmem:[#allocation11] sm:$0xff] %vm93, %v246
    // Predicated region
    $region38: #{tpu_custom_call.1} parent=1 // pred_check
      _
    $region39: #{tpu_custom_call.1} parent=1 // pred_check_branch
      %249 = sbr.rel (0) target = $region41
    $region40: #{tpu_custom_call.1} parent=1 // pred_region
      %s251 = ssub.s32 128, 128
      %252 = vsyncadd [#allocation5], %s251
      %s254 = sshll.u32 [#allocation11], 4
      %s255 = int_to_ptr.vmem [resolvable:$true] %s254
      %257 = dma.vmem_to_hbm [thread:$0]  %s255, 128, %s5, [#allocation5]
    $region41: #{tpu_custom_call.1} parent=1 // pred_fallthru
      _
    // Predicated region
    $region42: #{tpu_custom_call.1} parent=1 // pred_check
      _
    $region43: #{tpu_custom_call.1} parent=1 // pred_check_branch
      %259 = sbr.rel (0) target = $region45
    $region44: #{tpu_custom_call.1} parent=1 // pred_region
      %260 = dma.done [#allocation5], 128
    $region45: #{tpu_custom_call.1} parent=1 // pred_fallthru
      _
    %261 = vsyncpa [#allocation4], 1
    %262 = vsyncpa [#allocation7], 1
    %263 = vsyncpa [#allocation10], 1
    %264 = vsyncpa [#allocation5], 1

</llo_original>
